<compile_context>
chip_gen: v5e
topology: v5e:2x2
jax: 0.10.0
libtpu: 0.0.40
codegen_flags: <defaults>
</compile_context>

<pallas_src>
import math

import jax
import jax.numpy as jnp
from jax.experimental import pallas as pl
from jax.experimental.pallas import tpu as pltpu


def _round_up(x, m):
    return (x + m - 1) // m * m


def _normc_init(key, in_dim, out_dim, std):
    """normc initializer: normal samples, each output column scaled to norm=std."""
    w = jax.random.normal(key, (in_dim, out_dim), dtype=jnp.float32)
    return w * std / jnp.sqrt(jnp.sum(jnp.square(w), axis=0, keepdims=True))


def _make_fused_mlp_kernel(n_obs, obs_meta, layer_meta, a_total, non_lin):
    """Kernel over one batch tile.

    obs_meta:   ((row_off, d_k), ...) per observation — where obs k's slice of
                the layer-1 weight lives in the packed buffer (16-aligned rows).
    layer_meta: ((in_pad, out_pad, col, is_last), ...) per layer — layer i's
                weights sit at rows [0:in_pad] (per-obs row blocks for layer 0),
                cols [col:col+out_pad]; padding rows/cols are exact zeros so the
                padded math is exact.
    """

    def kernel(*refs):
        x_refs = refs[:n_obs]
        w_ref = refs[n_obs]
        b_ref = refs[n_obs + 1]
        out_ref = refs[n_obs + 2]

        h = None
        for li, (in_pad, out_pad, col, is_last) in enumerate(layer_meta):
            if li == 0:
                # Layer 1 as a K-split sum over per-observation inputs: avoids
                # any wrapper-side concat/cast/pad HBM round trip.
                z = None
                for (row_off, d_k), x_ref in zip(obs_meta, x_refs):
                    xk = x_ref[...].astype(jnp.bfloat16)
                    p = jnp.dot(xk,
                                w_ref[row_off:row_off + d_k, col:col + out_pad],
                                preferred_element_type=jnp.float32)
                    z = p if z is None else z + p
            else:
                z = jnp.dot(h, w_ref[0:in_pad, col:col + out_pad],
                            preferred_element_type=jnp.float32)
            z = z + b_ref[0:1, col:col + out_pad]
            if is_last:
                # Store only the true logit columns (lane-masked store, but
                # output DMA shrinks ~10x vs a 128-lane f32 slab).
                out_ref[...] = z[:, :a_total].astype(out_ref.dtype)
            else:
                # TODO(synk): a bf16 tanh would use the bf16 EUP path on
                # v6e/v7x; kept in f32 so v5e (no bf16 EUP) shares the code
                # path and the result matches the pure-JAX reference.
                h = non_lin(z).astype(jnp.bfloat16)

    return kernel


class FlattenConcatPolicyNetPallas:
    """Pallas port of maze's FlattenConcatPolicyNet forward pass."""

    def __init__(self, obs_shapes, action_logits_shapes, hidden_units,
                 non_lin=jnp.tanh, seed=1234):
        self.obs_keys = list(obs_shapes.keys())
        self.obs_shapes = {k: tuple(v) for k, v in obs_shapes.items()}
        self.obs_dims = {k: math.prod(self.obs_shapes[k]) for k in self.obs_keys}
        self.action_keys = list(action_logits_shapes.keys())
        self.action_units = {k: int(v[-1]) for k, v in action_logits_shapes.items()}
        self.hidden_units = list(hidden_units)
        self.non_lin = non_lin

        self.d_in = sum(self.obs_dims.values())

        key = jax.random.PRNGKey(seed)
        n_keys = len(self.hidden_units) + len(self.action_keys)
        keys = jax.random.split(key, n_keys)

        # --- DenseBlock params (normc std=1.0, zero bias): bf16 W / f32 b.
        self.dense_params = []
        prev = self.d_in
        ki = 0
        for h in self.hidden_units:
            w = _normc_init(keys[ki], prev, h, std=1.0).astype(jnp.bfloat16)
            b = jnp.zeros((1, h), dtype=jnp.float32)
            self.dense_params.append((w, b))
            prev = h
            ki += 1
        self.latent_dim = prev

        # --- LinearOutputBlock params per action head (normc std=0.01, zero bias).
        self.head_params = {}
        for a in self.action_keys:
            units = self.action_units[a]
            w = _normc_init(keys[ki], prev, units, std=0.01).astype(jnp.bfloat16)
            b = jnp.zeros((1, units), dtype=jnp.float32)
            self.head_params[a] = (w, b)
            ki += 1

        # --- Fuse all heads into one matmul: W_heads [latent, A_total].
        self.a_total = sum(self.action_units[a] for a in self.action_keys)
        w_heads = jnp.concatenate(
            [self.head_params[a][0] for a in self.action_keys], axis=1)
        b_heads = jnp.concatenate(
            [self.head_params[a][1] for a in self.action_keys], axis=1)

        # --- Layer-1 weight rows: per-obs blocks at 16-aligned row offsets
        #     (bf16 packs 16 rows per vreg); no 128-lane padding of d_in.
        obs_meta = []
        row = 0
        for k in self.obs_keys:
            d_k = self.obs_dims[k]
            obs_meta.append((row, d_k))
            row += _round_up(d_k, 16)
        self.obs_meta = tuple(obs_meta)
        d_rows = row

        # --- Pack all layers into one zero-padded bf16 weight buffer + one
        #     f32 bias buffer (3 resident operands, 1 DMA each).
        layers = list(self.dense_params) + [(w_heads, b_heads)]
        out_dims = [w.shape[1] for w, _ in layers]
        out_pads = [_round_up(d, 128) for d in out_dims]
        self.a_pad = out_pads[-1]
        self.n_total = sum(out_pads)
        self.k_max = max([d_rows] + out_pads[:-1])

        w_packed = jnp.zeros((self.k_max, self.n_total), dtype=jnp.bfloat16)
        b_packed = jnp.zeros((1, self.n_total), dtype=jnp.float32)
        layer_meta = []
        col = 0
        for idx, ((w, b), out_pad) in enumerate(zip(layers, out_pads)):
            o = w.shape[1]
            if idx == 0:
                # Scatter the layer-1 weight rows per observation block.
                d_start = 0
                for row_off, d_k in self.obs_meta:
                    w_packed = w_packed.at[row_off:row_off + d_k, col:col + o].set(
                        w[d_start:d_start + d_k])
                    d_start += d_k
                in_pad = None
            else:
                w_packed = w_packed.at[:w.shape[0], col:col + o].set(w)
                in_pad = out_pads[idx - 1]
            b_packed = b_packed.at[0, col:col + o].set(b.reshape(-1))
            layer_meta.append((in_pad, out_pad, col, idx == len(layers) - 1))
            col += out_pad
        self.layer_meta = tuple(layer_meta)
        self.w_packed = w_packed
        self.b_packed = b_packed

        # Per-head column offsets inside the fused head output.
        self.head_offsets = {}
        off = 0
        for a in self.action_keys:
            self.head_offsets[a] = off
            off += self.action_units[a]

        # Exact flop/transcendental counts for the XLA scheduler hint.
        dims = [self.d_in] + self.hidden_units + [self.a_total]
        self._flops_per_row = 2 * sum(dims[i] * dims[i + 1] for i in range(len(dims) - 1))
        self._transc_per_row = sum(self.hidden_units)

        self._kernel = _make_fused_mlp_kernel(
            len(self.obs_keys), self.obs_meta, self.layer_meta,
            self.a_total, self.non_lin)

    def __call__(self, x):
        batch = x[self.obs_keys[0]].shape[0]

        # FlattenBlock: free contiguous reshapes; obs stay f32 in HBM and are
        # cast to bf16 inside the kernel (no separate concat/pad/cast fusion).
        xs = [x[k].reshape(batch, -1) for k in self.obs_keys]

        # Batch tiling:
        #   - single un-padded full-batch tile when the batch fits (no copies),
        #   - even 2-way split for batch >= 512 (both v7x TensorCores),
        #   - 1024-row tiles beyond that (may pad the last tile only then).
        TB_MAX = 1024
        if batch > TB_MAX:
            tb = TB_MAX
        elif batch >= 512 and batch % 16 == 0:
            tb = batch // 2
        else:
            tb = batch
        b_pad = _round_up(batch, tb)
        if b_pad != batch:
            xs = [jnp.pad(xk, ((0, b_pad - batch), (0, 0))) for xk in xs]

        grid = (b_pad // tb,)

        obs_bytes = sum(b_pad * xk.shape[1] * xk.dtype.itemsize for xk in xs)
        cost = pl.CostEstimate(
            flops=int(self._flops_per_row * batch),
            transcendentals=int(self._transc_per_row * batch),
            bytes_accessed=int(obs_bytes + self.w_packed.size * 2
                               + self.b_packed.size * 4 + b_pad * self.a_total * 4),
        )

        # Per-obs x tiles are batch-tiled (double-buffered); packed weights /
        # biases use a constant block index so they stay VMEM-resident.
        in_specs = [pl.BlockSpec((tb, xk.shape[1]), lambda i: (i, 0)) for xk in xs]
        in_specs += [
            pl.BlockSpec((self.k_max, self.n_total), lambda i: (0, 0)),
            pl.BlockSpec((1, self.n_total), lambda i: (0, 0)),
        ]

        out = pl.pallas_call(
            self._kernel,
            out_shape=jax.ShapeDtypeStruct((b_pad, self.a_total), jnp.float32),
            grid_spec=pltpu.PrefetchScalarGridSpec(
                num_scalar_prefetch=0,
                grid=grid,
                in_specs=in_specs,
                out_specs=pl.BlockSpec((tb, self.a_total), lambda i: (i, 0)),
            ),
            compiler_params=pltpu.CompilerParams(
                dimension_semantics=("parallel",),   # 2 TCs on v7x; no-op elsewhere
            ),
            cost_estimate=cost,
        )(*xs, self.w_packed, self.b_packed)

        # Split the fused logit slab back into per-action logits.
        return {
            a: out[:batch, self.head_offsets[a]:self.head_offsets[a] + self.action_units[a]]
            for a in self.action_keys
        }

    def reference(self, x):
        """Pure-JAX reference (same bf16 weights / f32 accumulation path)."""
        batch = next(iter(x.values())).shape[0]
        flats = [x[k].reshape(batch, -1) for k in self.obs_keys]
        h = jnp.concatenate(flats, axis=-1).astype(jnp.bfloat16)
        for w, b in self.dense_params:
            z = jnp.dot(h, w, preferred_element_type=jnp.float32) + b
            h = self.non_lin(z).astype(jnp.bfloat16)
        out = {}
        for a in self.action_keys:
            w, b = self.head_params[a]
            out[a] = jnp.dot(h, w, preferred_element_type=jnp.float32) + b
        return out


if __name__ == "__main__":
    # Small shapes consistent with the module's forward:
    #   obs "image": per-sample shape (4, 8, 8)  (flattened to 256)
    #   obs "features": per-sample shape (16,)
    #   hidden_units = [64, 32]
    #   action heads: "action_move" -> 8 logits, "action_turn" -> 4 logits
    obs_shapes = {"image": (4, 8, 8), "features": (16,)}
    action_logits_shapes = {"action_move": (8,), "action_turn": (4,)}
    hidden_units = [64, 32]
    batch = 2

    net = FlattenConcatPolicyNetPallas(
        obs_shapes, action_logits_shapes, hidden_units, non_lin=jnp.tanh, seed=1234
    )

    key = jax.random.PRNGKey(0)
    k_img, k_feat = jax.random.split(key)
    x = {
        "image": jax.random.normal(k_img, (batch,) + obs_shapes["image"], dtype=jnp.float32),
        "features": jax.random.normal(k_feat, (batch,) + obs_shapes["features"], dtype=jnp.float32),
    }

    out = net(x)
    out = jax.tree_util.tree_map(jax.block_until_ready, out)

    ref = net.reference(x)
    for a in action_logits_shapes:
        assert out[a].shape == (batch, action_logits_shapes[a][-1])
        assert jnp.allclose(out[a], ref[a], atol=2e-3, rtol=2e-2), (
            a, jnp.max(jnp.abs(out[a] - ref[a])))

    print("KERNEL_OK")
</pallas_src>

<mosaic_0001>
module attributes {stable_mosaic.version = 11 : i64} {
  func.func @kernel(%arg0: i32, %arg1: memref<2x256xf32, #tpu.memory_space<vmem>>, %arg2: memref<2x16xf32, #tpu.memory_space<vmem>>, %arg3: memref<272x384xbf16, #tpu.memory_space<vmem>>, %arg4: memref<1x384xf32, #tpu.memory_space<vmem>>, %arg5: memref<2x12xf32, #tpu.memory_space<vmem>>) attributes {dimension_semantics = [#tpu.dimension_semantics<parallel>], iteration_bounds = array<i64: 1>, scalar_prefetch = 0 : i64, scratch_operands = 0 : i64, tpu.core_type = #tpu.core_type<tc>, window_params = [{transform_indices = @transform_0, window_bounds = array<i64: 2, 256>}, {transform_indices = @transform_1, window_bounds = array<i64: 2, 16>}, {pipeline_mode = #tpu.pipeline_mode<synchronous>, transform_indices = @transform_2, window_bounds = array<i64: 272, 384>}, {pipeline_mode = #tpu.pipeline_mode<synchronous>, transform_indices = @transform_3, window_bounds = array<i64: 1, 384>}, {transform_indices = @transform_4, window_bounds = array<i64: 2, 12>}]} {
    %c0 = arith.constant 0 : index
    %c0_0 = arith.constant 0 : index
    %0 = vector.load %arg1[%c0, %c0_0] : memref<2x256xf32, #tpu.memory_space<vmem>>, vector<2x256xf32>
    %1 = arith.truncf %0 : vector<2x256xf32> to vector<2x256xbf16>
    %c0_1 = arith.constant 0 : index
    %c0_2 = arith.constant 0 : index
    %2 = vector.load %arg3[%c0_1, %c0_2] : memref<272x384xbf16, #tpu.memory_space<vmem>>, vector<256x128xbf16>
    %cst = arith.constant dense<0.000000e+00> : vector<2x128xf32>
    %3 = tpu.matmul %1, %2, %cst {dimension_numbers = #tpu.dot_dimension_numbers<[1], [0], [0], [1], [0, 0, 1, 1], [], []>} : vector<2x256xbf16>, vector<256x128xbf16>, vector<2x128xf32> -> vector<2x128xf32>
    %c0_3 = arith.constant 0 : index
    %c0_4 = arith.constant 0 : index
    %4 = vector.load %arg2[%c0_3, %c0_4] : memref<2x16xf32, #tpu.memory_space<vmem>>, vector<2x16xf32>
    %5 = arith.truncf %4 : vector<2x16xf32> to vector<2x16xbf16>
    %c256 = arith.constant 256 : index
    %c0_5 = arith.constant 0 : index
    %6 = vector.load %arg3[%c256, %c0_5] : memref<272x384xbf16, #tpu.memory_space<vmem>>, vector<16x128xbf16>
    %cst_6 = arith.constant dense<0.000000e+00> : vector<2x128xf32>
    %7 = tpu.matmul %5, %6, %cst_6 {dimension_numbers = #tpu.dot_dimension_numbers<[1], [0], [0], [1], [0, 0, 1, 1], [], []>} : vector<2x16xbf16>, vector<16x128xbf16>, vector<2x128xf32> -> vector<2x128xf32>
    %8 = arith.addf %3, %7 : vector<2x128xf32>
    %c0_7 = arith.constant 0 : index
    %c0_8 = arith.constant 0 : index
    %9 = vector.load %arg4[%c0_7, %c0_8] : memref<1x384xf32, #tpu.memory_space<vmem>>, vector<1x128xf32>
    %10 = vector.broadcast %9 : vector<1x128xf32> to vector<2x128xf32>
    %11 = arith.addf %8, %10 : vector<2x128xf32>
    %12 = math.tanh %11 : vector<2x128xf32>
    %13 = arith.truncf %12 : vector<2x128xf32> to vector<2x128xbf16>
    %c0_9 = arith.constant 0 : index
    %c128 = arith.constant 128 : index
    %14 = vector.load %arg3[%c0_9, %c128] : memref<272x384xbf16, #tpu.memory_space<vmem>>, vector<128x128xbf16>
    %cst_10 = arith.constant dense<0.000000e+00> : vector<2x128xf32>
    %15 = tpu.matmul %13, %14, %cst_10 {dimension_numbers = #tpu.dot_dimension_numbers<[1], [0], [0], [1], [0, 0, 1, 1], [], []>} : vector<2x128xbf16>, vector<128x128xbf16>, vector<2x128xf32> -> vector<2x128xf32>
    %c0_11 = arith.constant 0 : index
    %c128_12 = arith.constant 128 : index
    %16 = vector.load %arg4[%c0_11, %c128_12] : memref<1x384xf32, #tpu.memory_space<vmem>>, vector<1x128xf32>
    %17 = vector.broadcast %16 : vector<1x128xf32> to vector<2x128xf32>
    %18 = arith.addf %15, %17 : vector<2x128xf32>
    %19 = math.tanh %18 : vector<2x128xf32>
    %20 = arith.truncf %19 : vector<2x128xf32> to vector<2x128xbf16>
    %c0_13 = arith.constant 0 : index
    %c256_14 = arith.constant 256 : index
    %21 = vector.load %arg3[%c0_13, %c256_14] : memref<272x384xbf16, #tpu.memory_space<vmem>>, vector<128x128xbf16>
    %cst_15 = arith.constant dense<0.000000e+00> : vector<2x128xf32>
    %22 = tpu.matmul %20, %21, %cst_15 {dimension_numbers = #tpu.dot_dimension_numbers<[1], [0], [0], [1], [0, 0, 1, 1], [], []>} : vector<2x128xbf16>, vector<128x128xbf16>, vector<2x128xf32> -> vector<2x128xf32>
    %c0_16 = arith.constant 0 : index
    %c256_17 = arith.constant 256 : index
    %23 = vector.load %arg4[%c0_16, %c256_17] : memref<1x384xf32, #tpu.memory_space<vmem>>, vector<1x128xf32>
    %24 = vector.broadcast %23 : vector<1x128xf32> to vector<2x128xf32>
    %25 = arith.addf %22, %24 : vector<2x128xf32>
    %26 = vector.extract_strided_slice %25 {offsets = [0, 0], sizes = [2, 12], strides = [1, 1]} : vector<2x128xf32> to vector<2x12xf32>
    %c0_18 = arith.constant 0 : index
    %c0_19 = arith.constant 0 : index
    %27 = vector.load %arg5[%c0_18, %c0_19] : memref<2x12xf32, #tpu.memory_space<vmem>>, vector<2x12xf32>
    tpu.vector_store %arg5[%c0_18, %c0_19], %26 {strides = array<i32>} : memref<2x12xf32, #tpu.memory_space<vmem>>, vector<2x12xf32>,
    return
  }
  func.func @transform_0(%arg0: i32) -> (i32, i32) {
    %c0_i32 = arith.constant 0 : i32
    %c0_i32_0 = arith.constant 0 : i32
    return %arg0, %c0_i32 : i32, i32
  }
  func.func @transform_1(%arg0: i32) -> (i32, i32) {
    %c0_i32 = arith.constant 0 : i32
    %c0_i32_0 = arith.constant 0 : i32
    return %arg0, %c0_i32 : i32, i32
  }
  func.func @transform_2(%arg0: i32) -> (i32, i32) {
    %c0_i32 = arith.constant 0 : i32
    %c0_i32_0 = arith.constant 0 : i32
    %c0_i32_1 = arith.constant 0 : i32
    return %c0_i32, %c0_i32_0 : i32, i32
  }
  func.func @transform_3(%arg0: i32) -> (i32, i32) {
    %c0_i32 = arith.constant 0 : i32
    %c0_i32_0 = arith.constant 0 : i32
    %c0_i32_1 = arith.constant 0 : i32
    return %c0_i32, %c0_i32_0 : i32, i32
  }
  func.func @transform_4(%arg0: i32) -> (i32, i32) {
    %c0_i32 = arith.constant 0 : i32
    %c0_i32_0 = arith.constant 0 : i32
    return %arg0, %c0_i32 : i32, i32
  }
}

</mosaic_0001>

<llo_original>
// kernel: tpu_custom_call.1
$region0: #{tpu_custom_call.1}
  #allocation0 [shape = 'u32[]', space=smem, size = 0x4, offset = 0x4, fixed_abs, tag = 'smem constant byte address 0x4 - core index']
  #allocation1 [shape = 'u32[72,128]{1,0:T(1,128)}', space=vmem, size = 0x9000, scoped, tag = 'internal scratch']
  %s0 = inlined_call_operand.hbm [shape: f32[2,256], index: 0, kind: input, shape index: {}]
  %s1 = inlined_call_operand.hbm [shape: f32[2,16], index: 1, kind: input, shape index: {}]
  %s2 = inlined_call_operand.hbm [shape: bf16[272,384], index: 2, kind: input, shape index: {}]
  %s3 = inlined_call_operand.hbm [shape: f32[1,384], index: 3, kind: input, shape index: {}]
  %s4 = inlined_call_operand.hbm [shape: f32[2,12], index: 4, kind: output, shape index: {}]
  %s5 = sld [smem:[#allocation0]]
  $region42: #{tpu_custom_call.1} parent=0
    _
  %s7 = ssub.s32 1, %s5
  %s8 = scalar_select 0, %s7, %s5
  $region1: #{tpu_custom_call.1} parent=0
    #allocation2 [shape = 'u8[2048]{0}', space=vmem, size = 0x800, scoped, tag = 'input window, operand 0, single buffered']
    #allocation3 [shape = 's32[1]{0}', space=sflag, size = 0x4, scoped, tag = 'scoped memory for tpu_custom_call.1']
    #allocation4 [shape = 's32[1]{0}', space=sflag, size = 0x4, scoped, tag = 'scoped memory for tpu_custom_call.1']
    #allocation5 [shape = 'u8[1024]{0}', space=vmem, size = 0x400, scoped, tag = 'input window, operand 1, single buffered']
    #allocation6 [shape = 's32[1]{0}', space=sflag, size = 0x4, scoped, tag = 'scoped memory for tpu_custom_call.1']
    #allocation7 [shape = 'u8[208896]{0}', space=vmem, size = 0x33000, scoped, tag = 'input window, operand 2, single buffered']
    #allocation8 [shape = 'u8[1536]{0}', space=vmem, size = 0x800, scoped, tag = 'input window, operand 3, single buffered']
    #allocation9 [shape = 's32[1]{0}', space=sflag, size = 0x4, scoped, tag = 'scoped memory for tpu_custom_call.1']
    #allocation10 [shape = 'u8[1024]{0}', space=vmem, size = 0x400, scoped, tag = 'output window, operand 0, single buffered']
    %9 = vsyncpa [#allocation3], 0
    %10 = vsyncpa [#allocation6], 0
    %11 = vsyncpa [#allocation9], 0
    %12 = vsyncpa [#allocation4], 0
    // Predicated region
    $region2: #{tpu_custom_call.1} parent=1 // pred_check
      _
    $region3: #{tpu_custom_call.1} parent=1 // pred_check_branch
      %14 = sbr.rel (0) target = $region5
    $region4: #{tpu_custom_call.1} parent=1 // pred_region
      %16 = vsyncadd [#allocation3], 0
      %s18 = sshll.u32 %s0, 4
      %s19 = int_to_ptr.hbm [resolvable:$true] %s18
      %s20 = sshll.u32 [#allocation2], 4
      %s21 = int_to_ptr.vmem [resolvable:$true] %s20
      %23 = dma.hbm_to_vmem [thread:$0]  %s19, 64, %s21, [#allocation3]
    $region5: #{tpu_custom_call.1} parent=1 // pred_fallthru
      _
    // Predicated region
    $region6: #{tpu_custom_call.1} parent=1 // pred_check
      _
    $region7: #{tpu_custom_call.1} parent=1 // pred_check_branch
      %25 = sbr.rel (0) target = $region9
    $region8: #{tpu_custom_call.1} parent=1 // pred_region
      %27 = vsyncadd [#allocation6], 0
      %s29 = sshll.u32 %s1, 4
      %s30 = int_to_ptr.hbm [resolvable:$true] %s29
      %s31 = sshll.u32 [#allocation5], 4
      %s32 = int_to_ptr.vmem [resolvable:$true] %s31
      %34 = dma.hbm_to_vmem [thread:$0]  %s30, 32, %s32, [#allocation6]
    $region9: #{tpu_custom_call.1} parent=1 // pred_fallthru
      _
    // Predicated region
    $region10: #{tpu_custom_call.1} parent=1 // pred_check
      _
    $region11: #{tpu_custom_call.1} parent=1 // pred_check_branch
      %36 = sbr.rel (0) target = $region13
    $region12: #{tpu_custom_call.1} parent=1 // pred_region
      %38 = vsyncadd [#allocation6], 0
      %s39 = sshll.u32 %s2, 4
      %s40 = int_to_ptr.hbm [resolvable:$true] %s39
      %s41 = sshll.u32 [#allocation7], 4
      %s42 = int_to_ptr.vmem [resolvable:$true] %s41
      %47 = dma.hbm_to_vmem [thread:$0]  %s40, 6528, %s42, [#allocation6], 192, 192, 12
    $region13: #{tpu_custom_call.1} parent=1 // pred_fallthru
      _
    // Predicated region
    $region14: #{tpu_custom_call.1} parent=1 // pred_check
      _
    $region15: #{tpu_custom_call.1} parent=1 // pred_check_branch
      %49 = sbr.rel (0) target = $region17
    $region16: #{tpu_custom_call.1} parent=1 // pred_region
      %51 = vsyncadd [#allocation9], 0
      %s53 = sshll.u32 %s3, 4
      %s54 = int_to_ptr.hbm [resolvable:$true] %s53
      %s55 = sshll.u32 [#allocation8], 4
      %s56 = int_to_ptr.vmem [resolvable:$true] %s55
      %58 = dma.hbm_to_vmem [thread:$0]  %s54, 48, %s56, [#allocation9]
    $region17: #{tpu_custom_call.1} parent=1 // pred_fallthru
      _
    // Predicated region
    $region18: #{tpu_custom_call.1} parent=1 // pred_check
      _
    $region19: #{tpu_custom_call.1} parent=1 // pred_check_branch
      %60 = sbr.rel (0) target = $region21
    $region20: #{tpu_custom_call.1} parent=1 // pred_region
      %62 = dma.done [#allocation3], 64
    $region21: #{tpu_custom_call.1} parent=1 // pred_fallthru
      _
    // Predicated region
    $region22: #{tpu_custom_call.1} parent=1 // pred_check
      _
    $region23: #{tpu_custom_call.1} parent=1 // pred_check_branch
      %64 = sbr.rel (0) target = $region25
    $region24: #{tpu_custom_call.1} parent=1 // pred_region
      %66 = dma.done [#allocation6], 32
    $region25: #{tpu_custom_call.1} parent=1 // pred_fallthru
      _
    // Predicated region
    $region26: #{tpu_custom_call.1} parent=1 // pred_check
      _
    $region27: #{tpu_custom_call.1} parent=1 // pred_check_branch
      %68 = sbr.rel (0) target = $region29
    $region28: #{tpu_custom_call.1} parent=1 // pred_region
      %70 = dma.done [#allocation6], 6528
    $region29: #{tpu_custom_call.1} parent=1 // pred_fallthru
      _
    // Predicated region
    $region30: #{tpu_custom_call.1} parent=1 // pred_check
      _
    $region31: #{tpu_custom_call.1} parent=1 // pred_check_branch
      %72 = sbr.rel (0) target = $region33
    $region32: #{tpu_custom_call.1} parent=1 // pred_region
      %74 = dma.done [#allocation9], 48
    $region33: #{tpu_custom_call.1} parent=1 // pred_fallthru
      _
    %v76 = vld [vmem:[#allocation2] sm:$0xf]
    %78 = vst [vmem:[#allocation1] ss:$4 sm:$0xff] %v76
    %v79 = vld.sshfl [vmem:[#allocation1] sm:$0xff pattern:$0x73625140]
    %v80 = vld.sshfl [vmem:[#allocation1 + $0x8] sm:$0xff pattern:$0x73625140]
    %v83 = vpack.c.bf16 %v79, %v79
    %v84 = vpack.c.bf16 %v80, %v80
    %v85 = vld [vmem:[#allocation7] sm:$0xf]
    %v86 = vld [vmem:[#allocation7 + $0xc] sm:$0xf]
    %v87 = vld [vmem:[#allocation7 + $0x18] sm:$0xf]
    %v88 = vld [vmem:[#allocation7 + $0x24] sm:$0xf]
    %v89 = vld [vmem:[#allocation7 + $0x30] sm:$0xf]
    %v90 = vld [vmem:[#allocation7 + $0x3c] sm:$0xf]
    %v91 = vld [vmem:[#allocation7 + $0x48] sm:$0xf]
    %v92 = vld [vmem:[#allocation7 + $0x54] sm:$0xf]
    %v93 = vld [vmem:[#allocation7 + $0x60] sm:$0xf]
    %v94 = vld [vmem:[#allocation7 + $0x6c] sm:$0xf]
    %v95 = vld [vmem:[#allocation7 + $0x78] sm:$0xf]
    %v96 = vld [vmem:[#allocation7 + $0x84] sm:$0xf]
    %v97 = vld [vmem:[#allocation7 + $0x90] sm:$0xf]
    %v98 = vld [vmem:[#allocation7 + $0x9c] sm:$0xf]
    %v99 = vld [vmem:[#allocation7 + $0xa8] sm:$0xf]
    %v100 = vld [vmem:[#allocation7 + $0xb4] sm:$0xf]
    %v101 = vld [vmem:[#allocation7 + $0xc0] sm:$0xf]
    %v102 = vld [vmem:[#allocation7 + $0xcc] sm:$0xf]
    %v103 = vld [vmem:[#allocation7 + $0xd8] sm:$0xf]
    %v104 = vld [vmem:[#allocation7 + $0xe4] sm:$0xf]
    %v105 = vld [vmem:[#allocation7 + $0xf0] sm:$0xf]
    %v106 = vld [vmem:[#allocation7 + $0xfc] sm:$0xf]
    %v107 = vld [vmem:[#allocation7 + $0x108] sm:$0xf]
    %v108 = vld [vmem:[#allocation7 + $0x114] sm:$0xf]
    %v109 = vld [vmem:[#allocation7 + $0x120] sm:$0xf]
    %v110 = vld [vmem:[#allocation7 + $0x12c] sm:$0xf]
    %v111 = vld [vmem:[#allocation7 + $0x138] sm:$0xf]
    %v112 = vld [vmem:[#allocation7 + $0x144] sm:$0xf]
    %v113 = vld [vmem:[#allocation7 + $0x150] sm:$0xf]
    %v114 = vld [vmem:[#allocation7 + $0x15c] sm:$0xf]
    %v115 = vld [vmem:[#allocation7 + $0x168] sm:$0xf]
    %v116 = vld [vmem:[#allocation7 + $0x174] sm:$0xf]
    %v117 = vld [vmem:[#allocation5] sm:$0x3]
    %v118 = vpack.c.bf16 %v117, %v117
    %v119 = vld [vmem:[#allocation7 + $0x180] sm:$0xf]
    %v120 = vld [vmem:[#allocation7 + $0x18c] sm:$0xf]
    %v123 = vunpack.c.l.b16 %v119
    %v124 = vunpack.c.l.b16 %v120
    %v125 = vpack.c.b16 %v124, %v123
    %vm127 = vcmask 130048
    %v129 = vsel %vm127, %v118, 0
    %131 = vmatpush.bf16.msra.mxu0 0
    %132 = vmatpush.bf16.msra.mxu0 0
    %133 = vmatpush.bf16.msra.mxu0 0
    %134 = vmatpush.bf16.msra.mxu0 0
    %135 = vmatpush.bf16.msra.mxu0 0
    %136 = vmatpush.bf16.msra.mxu0 0
    %137 = vmatpush.bf16.msra.mxu0 0
    %138 = vmatpush.bf16.msra.mxu0 %v125
    %139 = vmatmul.bf16.gmra.mxu0 %v129
    %v140 = vpop.f32.mrf.mxu0
    %v141 = vadd.f32 0.0, %v140
    %v142 = vpop.f32.mrf.mxu0
    %143 = vdwg.mxu0
    %v176 = vunpack.c.l.b16 %v85
    %v177 = vunpack.c.l.b16 %v86
    %v178 = vunpack.c.l.b16 %v87
    %v179 = vunpack.c.l.b16 %v88
    %v180 = vunpack.c.l.b16 %v89
    %v181 = vunpack.c.l.b16 %v90
    %v182 = vunpack.c.l.b16 %v91
    %v183 = vunpack.c.l.b16 %v92
    %v184 = vunpack.c.l.b16 %v93
    %v185 = vunpack.c.l.b16 %v94
    %v186 = vunpack.c.l.b16 %v95
    %v187 = vunpack.c.l.b16 %v96
    %v188 = vunpack.c.l.b16 %v97
    %v189 = vunpack.c.l.b16 %v98
    %v190 = vunpack.c.l.b16 %v99
    %v191 = vunpack.c.l.b16 %v100
    %v192 = vunpack.c.l.b16 %v101
    %v193 = vunpack.c.l.b16 %v102
    %v194 = vunpack.c.l.b16 %v103
    %v195 = vunpack.c.l.b16 %v104
    %v196 = vunpack.c.l.b16 %v105
    %v197 = vunpack.c.l.b16 %v106
    %v198 = vunpack.c.l.b16 %v107
    %v199 = vunpack.c.l.b16 %v108
    %v200 = vunpack.c.l.b16 %v109
    %v201 = vunpack.c.l.b16 %v110
    %v202 = vunpack.c.l.b16 %v111
    %v203 = vunpack.c.l.b16 %v112
    %v204 = vunpack.c.l.b16 %v113
    %v205 = vunpack.c.l.b16 %v114
    %v206 = vunpack.c.l.b16 %v115
    %v207 = vunpack.c.l.b16 %v116
    %v208 = vpack.c.b16 %v177, %v176
    %v209 = vpack.c.b16 %v179, %v178
    %v210 = vpack.c.b16 %v181, %v180
    %v211 = vpack.c.b16 %v183, %v182
    %v212 = vpack.c.b16 %v185, %v184
    %v213 = vpack.c.b16 %v187, %v186
    %v214 = vpack.c.b16 %v189, %v188
    %v215 = vpack.c.b16 %v191, %v190
    %v216 = vpack.c.b16 %v193, %v192
    %v217 = vpack.c.b16 %v195, %v194
    %v218 = vpack.c.b16 %v197, %v196
    %v219 = vpack.c.b16 %v199, %v198
    %v220 = vpack.c.b16 %v201, %v200
    %v221 = vpack.c.b16 %v203, %v202
    %v222 = vpack.c.b16 %v205, %v204
    %v223 = vpack.c.b16 %v207, %v206
    %240 = vmatpush.bf16.msra.mxu0 %v215
    %241 = vmatpush.bf16.msra.mxu0 %v214
    %242 = vmatpush.bf16.msra.mxu0 %v213
    %243 = vmatpush.bf16.msra.mxu0 %v212
    %244 = vmatpush.bf16.msra.mxu0 %v211
    %245 = vmatpush.bf16.msra.mxu0 %v210
    %246 = vmatpush.bf16.msra.mxu0 %v209
    %247 = vmatpush.bf16.msra.mxu0 %v208
    %248 = vmatmul.bf16.gmra.mxu0 %v83
    %v249 = vpop.f32.mrf.mxu0
    %v250 = vadd.f32 %v141, %v249
    %v251 = vpop.f32.mrf.mxu0
    %252 = vdwg.mxu0
    %253 = vmatpush.bf16.msra.mxu0 %v223
    %254 = vmatpush.bf16.msra.mxu0 %v222
    %255 = vmatpush.bf16.msra.mxu0 %v221
    %256 = vmatpush.bf16.msra.mxu0 %v220
    %257 = vmatpush.bf16.msra.mxu0 %v219
    %258 = vmatpush.bf16.msra.mxu0 %v218
    %259 = vmatpush.bf16.msra.mxu0 %v217
    %260 = vmatpush.bf16.msra.mxu0 %v216
    %261 = vmatmul.bf16.gmra.mxu0 %v84
    %v262 = vpop.f32.mrf.mxu0
    %v263 = vadd.f32 %v250, %v262
    %v264 = vpop.f32.mrf.mxu0
    %265 = vdwg.mxu0
    %v266 = vld [vmem:[#allocation8] sm:$0x1]
    %v268 = vperm.slane %v266, 0
    %v270 = vadd.f32 %v263, %v268
    %v271 = vtanh.pop %v270
    %v272 = vpack.c.bf16 %v271, %v271
    %v273 = vld [vmem:[#allocation7 + $0x4] sm:$0xf]
    %v274 = vld [vmem:[#allocation7 + $0x10] sm:$0xf]
    %v275 = vld [vmem:[#allocation7 + $0x1c] sm:$0xf]
    %v276 = vld [vmem:[#allocation7 + $0x28] sm:$0xf]
    %v277 = vld [vmem:[#allocation7 + $0x34] sm:$0xf]
    %v278 = vld [vmem:[#allocation7 + $0x40] sm:$0xf]
    %v279 = vld [vmem:[#allocation7 + $0x4c] sm:$0xf]
    %v280 = vld [vmem:[#allocation7 + $0x58] sm:$0xf]
    %v281 = vld [vmem:[#allocation7 + $0x64] sm:$0xf]
    %v282 = vld [vmem:[#allocation7 + $0x70] sm:$0xf]
    %v283 = vld [vmem:[#allocation7 + $0x7c] sm:$0xf]
    %v284 = vld [vmem:[#allocation7 + $0x88] sm:$0xf]
    %v285 = vld [vmem:[#allocation7 + $0x94] sm:$0xf]
    %v286 = vld [vmem:[#allocation7 + $0xa0] sm:$0xf]
    %v287 = vld [vmem:[#allocation7 + $0xac] sm:$0xf]
    %v288 = vld [vmem:[#allocation7 + $0xb8] sm:$0xf]
    %v289 = vld [vmem:[#allocation8 + $0x1] sm:$0x1]
    %v291 = vperm.slane %v289, 0
    %v309 = vunpack.c.l.b16 %v273
    %v310 = vunpack.c.l.b16 %v274
    %v311 = vunpack.c.l.b16 %v275
    %v312 = vunpack.c.l.b16 %v276
    %v313 = vunpack.c.l.b16 %v277
    %v314 = vunpack.c.l.b16 %v278
    %v315 = vunpack.c.l.b16 %v279
    %v316 = vunpack.c.l.b16 %v280
    %v317 = vunpack.c.l.b16 %v281
    %v318 = vunpack.c.l.b16 %v282
    %v319 = vunpack.c.l.b16 %v283
    %v320 = vunpack.c.l.b16 %v284
    %v321 = vunpack.c.l.b16 %v285
    %v322 = vunpack.c.l.b16 %v286
    %v323 = vunpack.c.l.b16 %v287
    %v324 = vunpack.c.l.b16 %v288
    %v325 = vpack.c.b16 %v310, %v309
    %v326 = vpack.c.b16 %v312, %v311
    %v327 = vpack.c.b16 %v314, %v313
    %v328 = vpack.c.b16 %v316, %v315
    %v329 = vpack.c.b16 %v318, %v317
    %v330 = vpack.c.b16 %v320, %v319
    %v331 = vpack.c.b16 %v322, %v321
    %v332 = vpack.c.b16 %v324, %v323
    %341 = vmatpush.bf16.msra.mxu0 %v332
    %342 = vmatpush.bf16.msra.mxu0 %v331
    %343 = vmatpush.bf16.msra.mxu0 %v330
    %344 = vmatpush.bf16.msra.mxu0 %v329
    %345 = vmatpush.bf16.msra.mxu0 %v328
    %346 = vmatpush.bf16.msra.mxu0 %v327
    %347 = vmatpush.bf16.msra.mxu0 %v326
    %348 = vmatpush.bf16.msra.mxu0 %v325
    %349 = vmatmul.bf16.gmra.mxu0 %v272
    %v350 = vpop.f32.mrf.mxu0
    %v351 = vadd.f32 %v291, %v350
    %v352 = vpop.f32.mrf.mxu0
    %353 = vdwg.mxu0
    %v354 = vtanh.pop %v351
    %v355 = vpack.c.bf16 %v354, %v354
    %v356 = vld [vmem:[#allocation7 + $0x8] sm:$0xf]
    %v357 = vld [vmem:[#allocation7 + $0x14] sm:$0xf]
    %v358 = vld [vmem:[#allocation7 + $0x20] sm:$0xf]
    %v359 = vld [vmem:[#allocation7 + $0x2c] sm:$0xf]
    %v360 = vld [vmem:[#allocation7 + $0x38] sm:$0xf]
    %v361 = vld [vmem:[#allocation7 + $0x44] sm:$0xf]
    %v362 = vld [vmem:[#allocation7 + $0x50] sm:$0xf]
    %v363 = vld [vmem:[#allocation7 + $0x5c] sm:$0xf]
    %v364 = vld [vmem:[#allocation7 + $0x68] sm:$0xf]
    %v365 = vld [vmem:[#allocation7 + $0x74] sm:$0xf]
    %v366 = vld [vmem:[#allocation7 + $0x80] sm:$0xf]
    %v367 = vld [vmem:[#allocation7 + $0x8c] sm:$0xf]
    %v368 = vld [vmem:[#allocation7 + $0x98] sm:$0xf]
    %v369 = vld [vmem:[#allocation7 + $0xa4] sm:$0xf]
    %v370 = vld [vmem:[#allocation7 + $0xb0] sm:$0xf]
    %v371 = vld [vmem:[#allocation7 + $0xbc] sm:$0xf]
    %v372 = vld [vmem:[#allocation8 + $0x2] sm:$0x1]
    %v374 = vperm.slane %v372, 0
    %v392 = vunpack.c.l.b16 %v356
    %v393 = vunpack.c.l.b16 %v357
    %v394 = vunpack.c.l.b16 %v358
    %v395 = vunpack.c.l.b16 %v359
    %v396 = vunpack.c.l.b16 %v360
    %v397 = vunpack.c.l.b16 %v361
    %v398 = vunpack.c.l.b16 %v362
    %v399 = vunpack.c.l.b16 %v363
    %v400 = vunpack.c.l.b16 %v364
    %v401 = vunpack.c.l.b16 %v365
    %v402 = vunpack.c.l.b16 %v366
    %v403 = vunpack.c.l.b16 %v367
    %v404 = vunpack.c.l.b16 %v368
    %v405 = vunpack.c.l.b16 %v369
    %v406 = vunpack.c.l.b16 %v370
    %v407 = vunpack.c.l.b16 %v371
    %v408 = vpack.c.b16 %v393, %v392
    %v409 = vpack.c.b16 %v395, %v394
    %v410 = vpack.c.b16 %v397, %v396
    %v411 = vpack.c.b16 %v399, %v398
    %v412 = vpack.c.b16 %v401, %v400
    %v413 = vpack.c.b16 %v403, %v402
    %v414 = vpack.c.b16 %v405, %v404
    %v415 = vpack.c.b16 %v407, %v406
    %424 = vmatpush.bf16.msra.mxu0 %v415
    %425 = vmatpush.bf16.msra.mxu0 %v414
    %426 = vmatpush.bf16.msra.mxu0 %v413
    %427 = vmatpush.bf16.msra.mxu0 %v412
    %428 = vmatpush.bf16.msra.mxu0 %v411
    %429 = vmatpush.bf16.msra.mxu0 %v410
    %430 = vmatpush.bf16.msra.mxu0 %v409
    %431 = vmatpush.bf16.msra.mxu0 %v408
    %432 = vmatmul.bf16.gmra.mxu0 %v355
    %v433 = vpop.f32.mrf.mxu0
    %v434 = vadd.f32 %v374, %v433
    %v435 = vpop.f32.mrf.mxu0
    %436 = vdwg.mxu0
    %vm437 = vcmask 91136
    %438 = vst.msk [vmem:[#allocation10] sm:$0x3] %vm437, %v434
    // Predicated region
    $region34: #{tpu_custom_call.1} parent=1 // pred_check
      _
    $region35: #{tpu_custom_call.1} parent=1 // pred_check_branch
      %440 = sbr.rel (0) target = $region37
    $region36: #{tpu_custom_call.1} parent=1 // pred_region
      %442 = vsyncadd [#allocation4], 0
      %s444 = sshll.u32 [#allocation10], 4
      %s445 = int_to_ptr.vmem [resolvable:$true] %s444
      %s446 = sshll.u32 %s4, 4
      %s447 = int_to_ptr.hbm [resolvable:$true] %s446
      %449 = dma.vmem_to_hbm [thread:$0]  %s445, 32, %s447, [#allocation4]
    $region37: #{tpu_custom_call.1} parent=1 // pred_fallthru
      _
    // Predicated region
    $region38: #{tpu_custom_call.1} parent=1 // pred_check
      _
    $region39: #{tpu_custom_call.1} parent=1 // pred_check_branch
      %451 = sbr.rel (0) target = $region41
    $region40: #{tpu_custom_call.1} parent=1 // pred_region
      %453 = dma.done [#allocation4], 32
    $region41: #{tpu_custom_call.1} parent=1 // pred_fallthru
      _
    %454 = vsyncpa [#allocation3], 1
    %455 = vsyncpa [#allocation6], 1
    %456 = vsyncpa [#allocation9], 1
    %457 = vsyncpa [#allocation4], 1

</llo_original>
